<compile_context>
chip_gen: v5e
topology: v5e:2x2
jax: 0.10.0
libtpu: 0.0.40
codegen_flags: <defaults>
</compile_context>

<pallas_src>
import functools
import math

import jax
import jax.numpy as jnp
from jax.experimental import pallas as pl
from jax.experimental.pallas import tpu as pltpu


def _simple_attention_kernel(x_ref, w_ref, a_ref, o_ref, *, batch, n):
    """Single grid step processing the whole batch.

    x_ref: (B*N, in_dim)    VMEM (batch folded into the MXU M dimension)
    w_ref: (in_dim, out_dim) VMEM
    a_ref: (1, out_dim)      VMEM (lane-dense)
    o_ref: (B, out_dim)      VMEM (single lane-dense output slab)
    """
    out_dim = w_ref.shape[1]

    # One MXU matmul for the whole batch, f32 accumulation; tanh on the EUP.
    e = jnp.tanh(
        jnp.dot(x_ref[...], w_ref[...], preferred_element_type=jnp.float32)
    )  # (B*N, out_dim)

    # View as (B, N, out_dim). Splitting the sublane axis by N (a multiple of
    # 8 here) is tile-aligned, so this is a free relabeling of tiles.
    e3 = e.reshape(batch, n, out_dim)

    # scores = e @ a per row, done as a VPU broadcast-multiply + lane reduce.
    # Result is lane-dense: (B, N) with N on the lane axis.
    a_b = a_ref[...].reshape(1, 1, out_dim)
    scores = jnp.sum(e3 * a_b, axis=-1)  # (B, N)

    # Numerically stable softmax over N (the module's dim=0), per batch row.
    # Exact division: denom is (B, 1), so the exact path costs nothing and
    # keeps us within tight tolerance of the PyTorch module.
    m = jnp.max(scores, axis=-1, keepdims=True)
    p = jnp.exp(scores - m)
    att = p / jnp.sum(p, axis=-1, keepdims=True)  # (B, N)

    # out[b, :] = sum_n att[b, n] * e[b, n, :]  (VPU mul + XLU sublane reduce)
    out = jnp.sum(att[:, :, None] * e3, axis=1)  # (B, out_dim)
    o_ref[...] = out.astype(o_ref.dtype)


def simple_attention_batched(x, W, a):
    """Batched SimpleAttention.

    x: (B, N, in_dim), W: (in_dim, out_dim), a: (out_dim, 1) -> (B, out_dim)
    Each batch element b computes the module's forward on x[b].
    """
    B, N, in_dim = x.shape
    in_dim_w, out_dim = W.shape
    assert in_dim == in_dim_w and a.shape == (out_dim, 1)

    # Free metadata reshapes outside the kernel:
    x_flat = x.reshape(B * N, in_dim)   # fold batch into the MXU M dimension
    a_lane = a.reshape(1, out_dim)      # lane-dense layout for `a`

    kernel = functools.partial(_simple_attention_kernel, batch=B, n=N)

    out = pl.pallas_call(
        kernel,
        out_shape=jax.ShapeDtypeStruct((B, out_dim), jnp.float32),
        grid=(1,),  # single step: whole batch per step (see header notes)
        in_specs=[
            pl.BlockSpec((B * N, in_dim), lambda i: (0, 0)),
            pl.BlockSpec((in_dim, out_dim), lambda i: (0, 0)),
            pl.BlockSpec((1, out_dim), lambda i: (0, 0)),
        ],
        out_specs=pl.BlockSpec((B, out_dim), lambda i: (0, 0)),
        compiler_params=pltpu.CompilerParams(
            dimension_semantics=("arbitrary",)
        ),
    )(x_flat, W, a_lane)
    return out


def simple_attention(x, W, a):
    """Module-faithful single-instance API: x (N, in_dim) -> (1, out_dim)."""
    return simple_attention_batched(x[None], W, a)  # (1, out_dim)


def xavier_uniform(key, shape, gain):
    fan_in, fan_out = shape[0], shape[1]
    bound = gain * math.sqrt(6.0 / (fan_in + fan_out))
    return jax.random.uniform(
        key, shape, dtype=jnp.float32, minval=-bound, maxval=bound
    )


def reference(x, W, a):
    # Pure-JAX reference of the PyTorch forward (single instance).
    e = jnp.tanh(x @ W)
    scores = e @ a
    att = jax.nn.softmax(scores, axis=0)
    return att.reshape(1, -1) @ e  # (1, out_dim)


if __name__ == "__main__":
    # Small shapes consistent with the module: B independent instances of
    # N "nodes" with in_dim features each.
    B, N, in_dim, out_dim = 8, 8, 16, 32

    key = jax.random.PRNGKey(0)
    kx, kw, ka = jax.random.split(key, 3)

    x = jax.random.normal(kx, (B, N, in_dim), dtype=jnp.float32)
    W = xavier_uniform(kw, (in_dim, out_dim), gain=1.414)
    a = xavier_uniform(ka, (out_dim, 1), gain=1.414)

    # Batched kernel: one pallas_call, one grid step for all B instances.
    out = simple_attention_batched(x, W, a)
    jax.block_until_ready(out)
    assert out.shape == (B, out_dim)

    ref = jax.vmap(lambda xb: reference(xb, W, a))(x).reshape(B, out_dim)
    err = jnp.max(jnp.abs(out - ref))
    assert jnp.allclose(out, ref, atol=1e-3, rtol=1e-3), float(err)

    # Single-instance path (exact module signature).
    out1 = simple_attention(x[0], W, a)
    jax.block_until_ready(out1)
    assert out1.shape == (1, out_dim)
    assert jnp.allclose(out1, reference(x[0], W, a), atol=1e-3, rtol=1e-3)

    print("KERNEL_OK")
</pallas_src>

<mosaic_0001>
module attributes {stable_mosaic.version = 11 : i64} {
  func.func @_simple_attention_kernel(%arg0: i32, %arg1: memref<64x16xf32, #tpu.memory_space<vmem>>, %arg2: memref<16x32xf32, #tpu.memory_space<vmem>>, %arg3: memref<1x32xf32, #tpu.memory_space<vmem>>, %arg4: memref<8x32xf32, #tpu.memory_space<vmem>>) attributes {dimension_semantics = [#tpu.dimension_semantics<arbitrary>], iteration_bounds = array<i64: 1>, scalar_prefetch = 0 : i64, scratch_operands = 0 : i64, tpu.core_type = #tpu.core_type<tc>, window_params = [{pipeline_mode = #tpu.pipeline_mode<synchronous>, transform_indices = @transform_0, window_bounds = array<i64: 64, 16>}, {pipeline_mode = #tpu.pipeline_mode<synchronous>, transform_indices = @transform_1, window_bounds = array<i64: 16, 32>}, {pipeline_mode = #tpu.pipeline_mode<synchronous>, transform_indices = @transform_2, window_bounds = array<i64: 1, 32>}, {pipeline_mode = #tpu.pipeline_mode<synchronous>, transform_indices = @transform_3, window_bounds = array<i64: 8, 32>}]} {
    %c0 = arith.constant 0 : index
    %c0_0 = arith.constant 0 : index
    %0 = vector.load %arg1[%c0, %c0_0] : memref<64x16xf32, #tpu.memory_space<vmem>>, vector<64x16xf32>
    %c0_1 = arith.constant 0 : index
    %c0_2 = arith.constant 0 : index
    %1 = vector.load %arg2[%c0_1, %c0_2] : memref<16x32xf32, #tpu.memory_space<vmem>>, vector<16x32xf32>
    %cst = arith.constant dense<0.000000e+00> : vector<64x32xf32>
    %2 = tpu.matmul %0, %1, %cst {dimension_numbers = #tpu.dot_dimension_numbers<[1], [0], [0], [1], [0, 0, 1, 1], [], []>} : vector<64x16xf32>, vector<16x32xf32>, vector<64x32xf32> -> vector<64x32xf32>
    %3 = math.tanh %2 : vector<64x32xf32>
    %4 = vector.shape_cast %3 : vector<64x32xf32> to vector<8x8x32xf32>
    %c0_3 = arith.constant 0 : index
    %c0_4 = arith.constant 0 : index
    %5 = vector.load %arg3[%c0_3, %c0_4] : memref<1x32xf32, #tpu.memory_space<vmem>>, vector<1x32xf32>
    %6 = vector.shape_cast %5 : vector<1x32xf32> to vector<1x1x32xf32>
    %7 = vector.broadcast %6 : vector<1x1x32xf32> to vector<8x8x32xf32>
    %8 = arith.mulf %4, %7 : vector<8x8x32xf32>
    %cst_5 = arith.constant dense<0.000000e+00> : vector<8x8xf32>
    %9 = vector.multi_reduction <add>, %8, %cst_5 [2] : vector<8x8x32xf32> to vector<8x8xf32>
    %cst_6 = arith.constant dense<0xFF800000> : vector<8xf32>
    %10 = vector.multi_reduction <maximumf>, %9, %cst_6 [1] : vector<8x8xf32> to vector<8xf32>
    %11 = vector.shape_cast %10 : vector<8xf32> to vector<8x1xf32>
    %12 = vector.broadcast %11 : vector<8x1xf32> to vector<8x8xf32>
    %13 = arith.subf %9, %12 : vector<8x8xf32>
    %14 = math.exp %13 : vector<8x8xf32>
    %cst_7 = arith.constant dense<0.000000e+00> : vector<8xf32>
    %15 = vector.multi_reduction <add>, %14, %cst_7 [1] : vector<8x8xf32> to vector<8xf32>
    %16 = vector.shape_cast %15 : vector<8xf32> to vector<8x1xf32>
    %17 = vector.broadcast %16 : vector<8x1xf32> to vector<8x8xf32>
    %18 = arith.divf %14, %17 : vector<8x8xf32>
    %19 = vector.shape_cast %18 : vector<8x8xf32> to vector<8x8x1xf32>
    %20 = vector.broadcast %19 : vector<8x8x1xf32> to vector<8x8x32xf32>
    %21 = arith.mulf %20, %4 : vector<8x8x32xf32>
    %cst_8 = arith.constant dense<0.000000e+00> : vector<8x32xf32>
    %22 = vector.multi_reduction <add>, %21, %cst_8 [1] : vector<8x8x32xf32> to vector<8x32xf32>
    %c0_9 = arith.constant 0 : index
    %c0_10 = arith.constant 0 : index
    %23 = vector.load %arg4[%c0_9, %c0_10] : memref<8x32xf32, #tpu.memory_space<vmem>>, vector<8x32xf32>
    tpu.vector_store %arg4[%c0_9, %c0_10], %22 {strides = array<i32>} : memref<8x32xf32, #tpu.memory_space<vmem>>, vector<8x32xf32>,
    return
  }
  func.func @transform_0(%arg0: i32) -> (i32, i32) {
    %c0_i32 = arith.constant 0 : i32
    %c0_i32_0 = arith.constant 0 : i32
    %c0_i32_1 = arith.constant 0 : i32
    return %c0_i32, %c0_i32_0 : i32, i32
  }
  func.func @transform_1(%arg0: i32) -> (i32, i32) {
    %c0_i32 = arith.constant 0 : i32
    %c0_i32_0 = arith.constant 0 : i32
    %c0_i32_1 = arith.constant 0 : i32
    return %c0_i32, %c0_i32_0 : i32, i32
  }
  func.func @transform_2(%arg0: i32) -> (i32, i32) {
    %c0_i32 = arith.constant 0 : i32
    %c0_i32_0 = arith.constant 0 : i32
    %c0_i32_1 = arith.constant 0 : i32
    return %c0_i32, %c0_i32_0 : i32, i32
  }
  func.func @transform_3(%arg0: i32) -> (i32, i32) {
    %c0_i32 = arith.constant 0 : i32
    %c0_i32_0 = arith.constant 0 : i32
    %c0_i32_1 = arith.constant 0 : i32
    return %c0_i32, %c0_i32_0 : i32, i32
  }
}

</mosaic_0001>

<llo_original>
// kernel: tpu_custom_call.1
$region0: #{tpu_custom_call.1}
  #allocation0 [shape = 'u32[]', space=smem, size = 0x4, offset = 0x4, fixed_abs, tag = 'smem constant byte address 0x4 - core index']
  #allocation1 [shape = 'u32[72,128]{1,0:T(1,128)}', space=vmem, size = 0x9000, scoped, tag = 'internal scratch']
  %s0 = inlined_call_operand.vmem [shape: f32[64,16], index: 0, kind: input, shape index: {}]
  %s1 = inlined_call_operand.vmem [shape: f32[16,32], index: 1, kind: input, shape index: {}]
  %s2 = inlined_call_operand.vmem [shape: f32[1,32], index: 2, kind: input, shape index: {}]
  %s3 = inlined_call_operand.hbm [shape: f32[8,32], index: 3, kind: output, shape index: {}]
  %s4 = sld [smem:[#allocation0]]
  $region22: #{tpu_custom_call.1} parent=0
    _
  %s6 = ssub.s32 1, %s4
  %s7 = scalar_select 0, %s6, %s4
  $region1: #{tpu_custom_call.1} parent=0
    #allocation2 [shape = 'u8[4096]{0}', space=vmem, size = 0x1000, scoped, tag = 'output window, operand 0, single buffered']
    #allocation3 [shape = 's32[1]{0}', space=sflag, size = 0x4, scoped, tag = 'scoped memory for tpu_custom_call.1']
    %8 = vsyncpa [#allocation3], 0
    // Predicated region
    $region2: #{tpu_custom_call.1} parent=1 // pred_check
      _
    $region3: #{tpu_custom_call.1} parent=1 // pred_check_branch
      %10 = sbr.rel (0) target = $region5
    $region4: #{tpu_custom_call.1} parent=1 // pred_region
      _
    $region5: #{tpu_custom_call.1} parent=1 // pred_fallthru
      _
    // Predicated region
    $region6: #{tpu_custom_call.1} parent=1 // pred_check
      _
    $region7: #{tpu_custom_call.1} parent=1 // pred_check_branch
      %12 = sbr.rel (0) target = $region9
    $region8: #{tpu_custom_call.1} parent=1 // pred_region
      _
    $region9: #{tpu_custom_call.1} parent=1 // pred_fallthru
      _
    // Predicated region
    $region10: #{tpu_custom_call.1} parent=1 // pred_check
      _
    $region11: #{tpu_custom_call.1} parent=1 // pred_check_branch
      %14 = sbr.rel (0) target = $region13
    $region12: #{tpu_custom_call.1} parent=1 // pred_region
      _
    $region13: #{tpu_custom_call.1} parent=1 // pred_fallthru
      _
    %v15 = vld [vmem:[%s0] sm:$0xff]
    %v16 = vld [vmem:[%s0 + $0x8] sm:$0xff]
    %v17 = vld [vmem:[%s0 + $0x10] sm:$0xff]
    %v18 = vld [vmem:[%s0 + $0x18] sm:$0xff]
    %v19 = vld [vmem:[%s0 + $0x20] sm:$0xff]
    %v20 = vld [vmem:[%s0 + $0x28] sm:$0xff]
    %v21 = vld [vmem:[%s0 + $0x30] sm:$0xff]
    %v22 = vld [vmem:[%s0 + $0x38] sm:$0xff]
    %v23 = vld [vmem:[%s1] sm:$0xff]
    %v24 = vld [vmem:[%s1 + $0x8] sm:$0xff]
    %vm25 = vcmask 130048
    %v27 = vsel %vm25, %v15, 0
    %v30 = vsel %vm25, %v16, 0
    %v33 = vsel %vm25, %v17, 0
    %v36 = vsel %vm25, %v18, 0
    %v39 = vsel %vm25, %v19, 0
    %v42 = vsel %vm25, %v20, 0
    %v45 = vsel %vm25, %v21, 0
    %v48 = vsel %vm25, %v22, 0
    %50 = vmatpush.msra.mxu0 0.0
    %51 = vmatpush.msra.mxu0 0.0
    %52 = vmatpush.msra.mxu0 0.0
    %53 = vmatpush.msra.mxu0 0.0
    %54 = vmatpush.msra.mxu0 0.0
    %55 = vmatpush.msra.mxu0 0.0
    %56 = vmatpush.msra.mxu0 0.0
    %57 = vmatpush.msra.mxu0 0.0
    %58 = vmatpush.msra.mxu0 0.0
    %59 = vmatpush.msra.mxu0 0.0
    %60 = vmatpush.msra.mxu0 0.0
    %61 = vmatpush.msra.mxu0 0.0
    %62 = vmatpush.msra.mxu0 0.0
    %63 = vmatpush.msra.mxu0 0.0
    %64 = vmatpush.msra.mxu0 %v24
    %65 = vmatpush.msra.mxu0 %v23
    %66 = vmatmul.f32.gmra.mxu0 %v27
    %v67 = vpop.f32.mrf.mxu0
    %v68 = vadd.f32 0.0, %v67
    %69 = vmatmul.f32.gmra.mxu0 %v30
    %v70 = vpop.f32.mrf.mxu0
    %v71 = vadd.f32 0.0, %v70
    %72 = vmatmul.f32.gmra.mxu0 %v33
    %v73 = vpop.f32.mrf.mxu0
    %v74 = vadd.f32 0.0, %v73
    %75 = vmatmul.f32.gmra.mxu0 %v36
    %v76 = vpop.f32.mrf.mxu0
    %v77 = vadd.f32 0.0, %v76
    %78 = vmatmul.f32.gmra.mxu0 %v39
    %v79 = vpop.f32.mrf.mxu0
    %v80 = vadd.f32 0.0, %v79
    %81 = vmatmul.f32.gmra.mxu0 %v42
    %v82 = vpop.f32.mrf.mxu0
    %v83 = vadd.f32 0.0, %v82
    %84 = vmatmul.f32.gmra.mxu0 %v45
    %v85 = vpop.f32.mrf.mxu0
    %v86 = vadd.f32 0.0, %v85
    %87 = vmatmul.f32.gmra.mxu0 %v48
    %v88 = vpop.f32.mrf.mxu0
    %v89 = vadd.f32 0.0, %v88
    %90 = vdwg.mxu0
    %v91 = vtanh.pop %v68
    %v92 = vtanh.pop %v71
    %v93 = vtanh.pop %v74
    %v94 = vtanh.pop %v77
    %v95 = vtanh.pop %v80
    %v96 = vtanh.pop %v83
    %v97 = vtanh.pop %v86
    %v98 = vtanh.pop %v89
    %v99 = vld [vmem:[%s2] sm:$0x1]
    %v101 = vperm.slane %v99, 0
    %v103 = vmul.f32 %v91, %v101
    %v104 = vmul.f32 %v92, %v101
    %v105 = vmul.f32 %v93, %v101
    %v106 = vmul.f32 %v94, %v101
    %v107 = vmul.f32 %v95, %v101
    %v108 = vmul.f32 %v96, %v101
    %v109 = vmul.f32 %v97, %v101
    %v110 = vmul.f32 %v98, %v101
    %vm111 = vcmask 261120
    %v112 = vsel %vm111, %v103, 0.0
    %113 = vadd.xlane.f32.xlu0 %v112
    %v114 = vpop.xlane.xlu0 %113
    %v115 = vsel %vm111, %v104, 0.0
    %116 = vadd.xlane.f32.xlu0 %v115
    %v117 = vpop.xlane.xlu0 %116
    %v118 = vsel %vm111, %v105, 0.0
    %119 = vadd.xlane.f32.xlu0 %v118
    %v120 = vpop.xlane.xlu0 %119
    %v121 = vsel %vm111, %v106, 0.0
    %122 = vadd.xlane.f32.xlu0 %v121
    %v123 = vpop.xlane.xlu0 %122
    %v124 = vsel %vm111, %v107, 0.0
    %125 = vadd.xlane.f32.xlu0 %v124
    %v126 = vpop.xlane.xlu0 %125
    %v127 = vsel %vm111, %v108, 0.0
    %128 = vadd.xlane.f32.xlu0 %v127
    %v129 = vpop.xlane.xlu0 %128
    %v130 = vsel %vm111, %v109, 0.0
    %131 = vadd.xlane.f32.xlu0 %v130
    %v132 = vpop.xlane.xlu0 %131
    %v133 = vsel %vm111, %v110, 0.0
    %134 = vadd.xlane.f32.xlu0 %v133
    %v135 = vpop.xlane.xlu0 %134
    %v144 = vlaneseq
    %v145 = vand.u32 %v144, 127
    %v146 = vperm.slane %v114, %v145
    %v147 = vperm.slane %v117, %v145
    %v148 = vperm.slane %v120, %v145
    %v149 = vperm.slane %v123, %v145
    %v150 = vperm.slane %v126, %v145
    %v151 = vperm.slane %v129, %v145
    %v152 = vperm.slane %v132, %v145
    %v153 = vperm.slane %v135, %v145
    %vm154 = vcmask 1041409
    %v155 = vsel %vm154, %v147, %v146
    %vm156 = vcmask 1042434
    %v157 = vsel %vm156, %v148, %v155
    %vm158 = vcmask 1043459
    %v159 = vsel %vm158, %v149, %v157
    %vm160 = vcmask 1044484
    %v161 = vsel %vm160, %v150, %v159
    %vm162 = vcmask 1045509
    %v163 = vsel %vm162, %v151, %v161
    %vm164 = vcmask 1046534
    %v165 = vsel %vm164, %v152, %v163
    %vm166 = vcmask 1047559
    %v167 = vsel %vm166, %v153, %v165
    %vm169 = vcmask 64512
    %v170 = vsel %vm169, %v167, -inf
    %171 = vmax.xlane.f32.xlu0 %v170
    %v172 = vpop.xlane.xlu0 %171
    %v174 = vperm.slane %v172, 0
    %v175 = vperm.slane %v172, 1
    %v176 = vperm.slane %v172, 2
    %v177 = vperm.slane %v172, 3
    %v178 = vperm.slane %v172, 4
    %v179 = vperm.slane %v172, 5
    %v180 = vperm.slane %v172, 6
    %v181 = vperm.slane %v172, 7
    %v190 = vsub.f32 %v114, %v174
    %v191 = vsub.f32 %v117, %v175
    %v192 = vsub.f32 %v120, %v176
    %v193 = vsub.f32 %v123, %v177
    %v194 = vsub.f32 %v126, %v178
    %v195 = vsub.f32 %v129, %v179
    %v196 = vsub.f32 %v132, %v180
    %v197 = vsub.f32 %v135, %v181
    %v198 = vmul.f32 %v190, 1.442695
    %v199 = vpow.pop %v198
    %v200 = vmul.f32 %v191, 1.442695
    %v201 = vpow.pop %v200
    %v202 = vmul.f32 %v192, 1.442695
    %v203 = vpow.pop %v202
    %v204 = vmul.f32 %v193, 1.442695
    %v205 = vpow.pop %v204
    %v206 = vmul.f32 %v194, 1.442695
    %v207 = vpow.pop %v206
    %v208 = vmul.f32 %v195, 1.442695
    %v209 = vpow.pop %v208
    %v210 = vmul.f32 %v196, 1.442695
    %v211 = vpow.pop %v210
    %v212 = vmul.f32 %v197, 1.442695
    %v213 = vpow.pop %v212
    %222 = vset.pattern.permute.xlu0 0
    %223 = vperm.xlu0 %222, %v199
    %v224 = vpop.permute.xlu0 %223
    %225 = vset.pattern.permute.xlu0 0
    %226 = vperm.xlu0 %225, %v201
    %v227 = vpop.permute.xlu0 %226
    %228 = vset.pattern.permute.xlu0 0
    %229 = vperm.xlu0 %228, %v203
    %v230 = vpop.permute.xlu0 %229
    %231 = vset.pattern.permute.xlu0 0
    %232 = vperm.xlu0 %231, %v205
    %v233 = vpop.permute.xlu0 %232
    %234 = vset.pattern.permute.xlu0 0
    %235 = vperm.xlu0 %234, %v207
    %v236 = vpop.permute.xlu0 %235
    %237 = vset.pattern.permute.xlu0 0
    %238 = vperm.xlu0 %237, %v209
    %v239 = vpop.permute.xlu0 %238
    %240 = vset.pattern.permute.xlu0 0
    %241 = vperm.xlu0 %240, %v211
    %v242 = vpop.permute.xlu0 %241
    %243 = vset.pattern.permute.xlu0 0
    %244 = vperm.xlu0 %243, %v213
    %v245 = vpop.permute.xlu0 %244
    %v246 = vperm.slane %v224, %v145
    %v247 = vperm.slane %v227, %v145
    %v248 = vperm.slane %v230, %v145
    %v249 = vperm.slane %v233, %v145
    %v250 = vperm.slane %v236, %v145
    %v251 = vperm.slane %v239, %v145
    %v252 = vperm.slane %v242, %v145
    %v253 = vperm.slane %v245, %v145
    %v254 = vsel %vm154, %v247, %v246
    %v255 = vsel %vm156, %v248, %v254
    %v256 = vsel %vm158, %v249, %v255
    %v257 = vsel %vm160, %v250, %v256
    %v258 = vsel %vm162, %v251, %v257
    %v259 = vsel %vm164, %v252, %v258
    %v260 = vsel %vm166, %v253, %v259
    %v262 = vsel %vm169, %v260, 0.0
    %263 = vadd.xlane.f32.xlu0 %v262
    %v264 = vpop.xlane.xlu0 %263
    %v266 = vperm.slane %v264, 0
    %v267 = vperm.slane %v264, 1
    %v268 = vperm.slane %v264, 2
    %v269 = vperm.slane %v264, 3
    %v270 = vperm.slane %v264, 4
    %v271 = vperm.slane %v264, 5
    %v272 = vperm.slane %v264, 6
    %v273 = vperm.slane %v264, 7
    %v282 = vrcp.pop %v266
    %v283 = vmul.f32 %v266, %v282
    %v284 = vsub.f32 1.0, %v283
    %v285 = vmul.f32 %v282, %v284
    %v286 = vadd.f32 %v282, %v285
    %vm287 = vweird.f32 %v266
    %vm288 = vweird.f32 %v282
    %vm289 = vmor %vm287, %vm288
    %v290 = vsel %vm289, %v282, %v286
    %v291 = vand.u32 2147483647, %v266
    %vm292 = vcmp.eq.f32.partialorder %v291, 8.507059e+37
    %v293 = vand.u32 %v266, 2147483648
    %v294 = vor.u32 1.1754944e-38, %v293
    %v295 = vsel %vm292, %v294, %v290
    %v296 = vmul.f32 %v199, %v295
    %v297 = vrcp.pop %v267
    %v298 = vmul.f32 %v267, %v297
    %v299 = vsub.f32 1.0, %v298
    %v300 = vmul.f32 %v297, %v299
    %v301 = vadd.f32 %v297, %v300
    %vm302 = vweird.f32 %v267
    %vm303 = vweird.f32 %v297
    %vm304 = vmor %vm302, %vm303
    %v305 = vsel %vm304, %v297, %v301
    %v306 = vand.u32 2147483647, %v267
    %vm307 = vcmp.eq.f32.partialorder %v306, 8.507059e+37
    %v308 = vand.u32 %v267, 2147483648
    %v309 = vor.u32 1.1754944e-38, %v308
    %v310 = vsel %vm307, %v309, %v305
    %v311 = vmul.f32 %v201, %v310
    %v312 = vrcp.pop %v268
    %v313 = vmul.f32 %v268, %v312
    %v314 = vsub.f32 1.0, %v313
    %v315 = vmul.f32 %v312, %v314
    %v316 = vadd.f32 %v312, %v315
    %vm317 = vweird.f32 %v268
    %vm318 = vweird.f32 %v312
    %vm319 = vmor %vm317, %vm318
    %v320 = vsel %vm319, %v312, %v316
    %v321 = vand.u32 2147483647, %v268
    %vm322 = vcmp.eq.f32.partialorder %v321, 8.507059e+37
    %v323 = vand.u32 %v268, 2147483648
    %v324 = vor.u32 1.1754944e-38, %v323
    %v325 = vsel %vm322, %v324, %v320
    %v326 = vmul.f32 %v203, %v325
    %v327 = vrcp.pop %v269
    %v328 = vmul.f32 %v269, %v327
    %v329 = vsub.f32 1.0, %v328
    %v330 = vmul.f32 %v327, %v329
    %v331 = vadd.f32 %v327, %v330
    %vm332 = vweird.f32 %v269
    %vm333 = vweird.f32 %v327
    %vm334 = vmor %vm332, %vm333
    %v335 = vsel %vm334, %v327, %v331
    %v336 = vand.u32 2147483647, %v269
    %vm337 = vcmp.eq.f32.partialorder %v336, 8.507059e+37
    %v338 = vand.u32 %v269, 2147483648
    %v339 = vor.u32 1.1754944e-38, %v338
    %v340 = vsel %vm337, %v339, %v335
    %v341 = vmul.f32 %v205, %v340
    %v342 = vrcp.pop %v270
    %v343 = vmul.f32 %v270, %v342
    %v344 = vsub.f32 1.0, %v343
    %v345 = vmul.f32 %v342, %v344
    %v346 = vadd.f32 %v342, %v345
    %vm347 = vweird.f32 %v270
    %vm348 = vweird.f32 %v342
    %vm349 = vmor %vm347, %vm348
    %v350 = vsel %vm349, %v342, %v346
    %v351 = vand.u32 2147483647, %v270
    %vm352 = vcmp.eq.f32.partialorder %v351, 8.507059e+37
    %v353 = vand.u32 %v270, 2147483648
    %v354 = vor.u32 1.1754944e-38, %v353
    %v355 = vsel %vm352, %v354, %v350
    %v356 = vmul.f32 %v207, %v355
    %v357 = vrcp.pop %v271
    %v358 = vmul.f32 %v271, %v357
    %v359 = vsub.f32 1.0, %v358
    %v360 = vmul.f32 %v357, %v359
    %v361 = vadd.f32 %v357, %v360
    %vm362 = vweird.f32 %v271
    %vm363 = vweird.f32 %v357
    %vm364 = vmor %vm362, %vm363
    %v365 = vsel %vm364, %v357, %v361
    %v366 = vand.u32 2147483647, %v271
    %vm367 = vcmp.eq.f32.partialorder %v366, 8.507059e+37
    %v368 = vand.u32 %v271, 2147483648
    %v369 = vor.u32 1.1754944e-38, %v368
    %v370 = vsel %vm367, %v369, %v365
    %v371 = vmul.f32 %v209, %v370
    %v372 = vrcp.pop %v272
    %v373 = vmul.f32 %v272, %v372
    %v374 = vsub.f32 1.0, %v373
    %v375 = vmul.f32 %v372, %v374
    %v376 = vadd.f32 %v372, %v375
    %vm377 = vweird.f32 %v272
    %vm378 = vweird.f32 %v372
    %vm379 = vmor %vm377, %vm378
    %v380 = vsel %vm379, %v372, %v376
    %v381 = vand.u32 2147483647, %v272
    %vm382 = vcmp.eq.f32.partialorder %v381, 8.507059e+37
    %v383 = vand.u32 %v272, 2147483648
    %v384 = vor.u32 1.1754944e-38, %v383
    %v385 = vsel %vm382, %v384, %v380
    %v386 = vmul.f32 %v211, %v385
    %v387 = vrcp.pop %v273
    %v388 = vmul.f32 %v273, %v387
    %v389 = vsub.f32 1.0, %v388
    %v390 = vmul.f32 %v387, %v389
    %v391 = vadd.f32 %v387, %v390
    %vm392 = vweird.f32 %v273
    %vm393 = vweird.f32 %v387
    %vm394 = vmor %vm392, %vm393
    %v395 = vsel %vm394, %v387, %v391
    %v396 = vand.u32 2147483647, %v273
    %vm397 = vcmp.eq.f32.partialorder %v396, 8.507059e+37
    %v398 = vand.u32 %v273, 2147483648
    %v399 = vor.u32 1.1754944e-38, %v398
    %v400 = vsel %vm397, %v399, %v395
    %v401 = vmul.f32 %v213, %v400
    %403 = vset.pattern.permute.xlu0 0
    %404 = vperm.xlu0 %403, %v296
    %v405 = vpop.permute.xlu0 %404
    %408 = vset.pattern.permute.xlu0 0
    %409 = vperm.xlu0 %408, %v311
    %v410 = vpop.permute.xlu0 %409
    %413 = vset.pattern.permute.xlu0 0
    %414 = vperm.xlu0 %413, %v326
    %v415 = vpop.permute.xlu0 %414
    %418 = vset.pattern.permute.xlu0 0
    %419 = vperm.xlu0 %418, %v341
    %v420 = vpop.permute.xlu0 %419
    %423 = vset.pattern.permute.xlu0 0
    %424 = vperm.xlu0 %423, %v356
    %v425 = vpop.permute.xlu0 %424
    %428 = vset.pattern.permute.xlu0 0
    %429 = vperm.xlu0 %428, %v371
    %v430 = vpop.permute.xlu0 %429
    %433 = vset.pattern.permute.xlu0 0
    %434 = vperm.xlu0 %433, %v386
    %v435 = vpop.permute.xlu0 %434
    %438 = vset.pattern.permute.xlu0 0
    %439 = vperm.xlu0 %438, %v401
    %v440 = vpop.permute.xlu0 %439
    %v442 = vmul.f32 %v405, %v91
    %v443 = vmul.f32 %v410, %v92
    %v444 = vmul.f32 %v415, %v93
    %v445 = vmul.f32 %v420, %v94
    %v446 = vmul.f32 %v425, %v95
    %v447 = vmul.f32 %v430, %v96
    %v448 = vmul.f32 %v435, %v97
    %v449 = vmul.f32 %v440, %v98
    %v450 = vsel %vm111, %v442, 0.0
    %v451 = vrot.slane %v450, 4
    %v452 = vadd.f32 %v450, %v451
    %v453 = vrot.slane %v452, 2
    %v454 = vadd.f32 %v452, %v453
    %v455 = vrot.slane %v454, 1
    %v456 = vadd.f32 %v454, %v455
    %v457 = vsel %vm111, %v443, 0.0
    %v458 = vrot.slane %v457, 4
    %v459 = vadd.f32 %v457, %v458
    %v460 = vrot.slane %v459, 2
    %v461 = vadd.f32 %v459, %v460
    %v462 = vrot.slane %v461, 1
    %v463 = vadd.f32 %v461, %v462
    %v464 = vsel %vm111, %v444, 0.0
    %v465 = vrot.slane %v464, 4
    %v466 = vadd.f32 %v464, %v465
    %v467 = vrot.slane %v466, 2
    %v468 = vadd.f32 %v466, %v467
    %v469 = vrot.slane %v468, 1
    %v470 = vadd.f32 %v468, %v469
    %v471 = vsel %vm111, %v445, 0.0
    %v472 = vrot.slane %v471, 4
    %v473 = vadd.f32 %v471, %v472
    %v474 = vrot.slane %v473, 2
    %v475 = vadd.f32 %v473, %v474
    %v476 = vrot.slane %v475, 1
    %v477 = vadd.f32 %v475, %v476
    %v478 = vsel %vm111, %v446, 0.0
    %v479 = vrot.slane %v478, 4
    %v480 = vadd.f32 %v478, %v479
    %v481 = vrot.slane %v480, 2
    %v482 = vadd.f32 %v480, %v481
    %v483 = vrot.slane %v482, 1
    %v484 = vadd.f32 %v482, %v483
    %v485 = vsel %vm111, %v447, 0.0
    %v486 = vrot.slane %v485, 4
    %v487 = vadd.f32 %v485, %v486
    %v488 = vrot.slane %v487, 2
    %v489 = vadd.f32 %v487, %v488
    %v490 = vrot.slane %v489, 1
    %v491 = vadd.f32 %v489, %v490
    %v492 = vsel %vm111, %v448, 0.0
    %v493 = vrot.slane %v492, 4
    %v494 = vadd.f32 %v492, %v493
    %v495 = vrot.slane %v494, 2
    %v496 = vadd.f32 %v494, %v495
    %v497 = vrot.slane %v496, 1
    %v498 = vadd.f32 %v496, %v497
    %v499 = vsel %vm111, %v449, 0.0
    %v500 = vrot.slane %v499, 4
    %v501 = vadd.f32 %v499, %v500
    %v502 = vrot.slane %v501, 2
    %v503 = vadd.f32 %v501, %v502
    %v504 = vrot.slane %v503, 1
    %v505 = vadd.f32 %v503, %v504
    %v514 = vsel %vm154, %v463, %v456
    %v515 = vsel %vm156, %v470, %v514
    %v516 = vsel %vm158, %v477, %v515
    %v517 = vsel %vm160, %v484, %v516
    %v518 = vsel %vm162, %v491, %v517
    %v519 = vsel %vm164, %v498, %v518
    %v520 = vsel %vm166, %v505, %v519
    %522 = vst.msk [vmem:[#allocation2] sm:$0xff] %vm111, %v520
    // Predicated region
    $region14: #{tpu_custom_call.1} parent=1 // pred_check
      _
    $region15: #{tpu_custom_call.1} parent=1 // pred_check_branch
      %524 = sbr.rel (0) target = $region17
    $region16: #{tpu_custom_call.1} parent=1 // pred_region
      %526 = vsyncadd [#allocation3], 0
      %s528 = sshll.u32 [#allocation2], 4
      %s529 = int_to_ptr.vmem [resolvable:$true] %s528
      %s530 = sshll.u32 %s3, 4
      %s531 = int_to_ptr.hbm [resolvable:$true] %s530
      %533 = dma.vmem_to_hbm [thread:$0]  %s529, 128, %s531, [#allocation3]
    $region17: #{tpu_custom_call.1} parent=1 // pred_fallthru
      _
    // Predicated region
    $region18: #{tpu_custom_call.1} parent=1 // pred_check
      _
    $region19: #{tpu_custom_call.1} parent=1 // pred_check_branch
      %535 = sbr.rel (0) target = $region21
    $region20: #{tpu_custom_call.1} parent=1 // pred_region
      %537 = dma.done [#allocation3], 128
    $region21: #{tpu_custom_call.1} parent=1 // pred_fallthru
      _
    %538 = vsyncpa [#allocation3], 1

</llo_original>
